<compile_context>
chip_gen: v5e
topology: v5e:2x2
jax: 0.10.0
libtpu: 0.0.40
codegen_flags: <defaults>
</compile_context>

<pallas_src>
import jax
import jax.numpy as jnp
from jax import lax
from jax.experimental import pallas as pl
from jax.experimental.pallas import tpu as pltpu

BN_EPS = 1e-5
LANE = 128


def _round_up(x, m):
    return (x + m - 1) // m * m


def _pick_row_tile(total, target):
    """Largest multiple-of-8 divisor of `total` that is <= target (else total)."""
    if total <= target:
        return total
    for t in range(target - target % 8, 7, -8):
        if total % t == 0:
            return t
    return total  # no aligned divisor: fall back to a single full block


def conv_stats_kernel(x_ref, w_ref, y_ref, sum_ref, ssq_ref):
    """Pass 1: one (rows, 9*Cin) @ (9*Cin, Cp) MXU matmul per row tile, plus
    per-channel sum / sum-of-squares accumulation for the BatchNorm stats.

    x_ref   : (1, ROWS, Kp)  bf16  channel-packed 3x3 neighborhoods
    w_ref   : (Kp, Cp)       bf16  packed conv weights
    y_ref   : (1, ROWS, Cp)  bf16  conv output tile (stored once, no RMW)
    sum_ref : (1, Cp)        f32   resident per-channel sum accumulator
    ssq_ref : (1, Cp)        f32   resident per-channel sum(y^2) accumulator
    """
    @pl.when((pl.program_id(0) == 0) & (pl.program_id(1) == 0))
    def _init():
        sum_ref[...] = jnp.zeros_like(sum_ref)
        ssq_ref[...] = jnp.zeros_like(ssq_ref)

    y = jnp.dot(x_ref[0], w_ref[...], preferred_element_type=jnp.float32)
    y_ref[0] = y.astype(y_ref.dtype)
    sum_ref[...] += jnp.sum(y, axis=0, keepdims=True)
    ssq_ref[...] += jnp.sum(y * y, axis=0, keepdims=True)


def bn_relu_kernel(y_ref, scale_ref, shift_ref, o_ref):
    """Pass 2: out = relu(y * scale + shift) — one FMA + max per element."""
    y = y_ref[...].astype(jnp.float32)
    o_ref[...] = jnp.maximum(y * scale_ref[...] + shift_ref[...], 0.0)


@jax.jit
def unit_forward(x, weight, bias, gamma, beta):
    """x: (N, Cin, H, W) NCHW. weight: (Cout, Cin, 3, 3). Returns NCHW f32.

    `bias` is accepted for interface parity but is mathematically irrelevant:
    BatchNorm over batch statistics cancels any per-channel conv bias.
    """
    del bias
    n, cin, h, w = x.shape
    cout = weight.shape[0]
    cp = _round_up(cout, LANE)          # lane-dense output channel axis
    k9 = 9 * cin
    kp = _round_up(k9, 16)              # bf16 sublane-friendly contraction dim
    hw = h * w

    # ---- channel-only im2col: (N, H*W, 9*Cin) bf16 (9 slices + concat; the
    #      input side is tiny relative to the Cp=128 output traffic).
    x_nhwc = jnp.transpose(x, (0, 2, 3, 1)).astype(jnp.float32)
    x_pad = jnp.pad(x_nhwc, ((0, 0), (1, 1), (1, 1), (0, 0)))
    taps = [x_pad[:, di:di + h, dj:dj + w, :]
            for di in range(3) for dj in range(3)]
    x_packed = jnp.concatenate(taps, axis=-1).reshape(n, hw, k9)
    x_packed = jnp.pad(x_packed, ((0, 0), (0, 0), (0, kp - k9)))
    x_packed = x_packed.astype(jnp.bfloat16)

    # ---- weights: (Cout, Cin, 3, 3) -> (9*Cin, Cp) bf16, matching tap order
    w_packed = jnp.transpose(weight.astype(jnp.float32), (2, 3, 1, 0))
    w_packed = w_packed.reshape(k9, cout)
    w_packed = jnp.pad(w_packed, ((0, kp - k9), (0, cp - cout)))
    w_packed = w_packed.astype(jnp.bfloat16)

    g_vec = jnp.pad(gamma.astype(jnp.float32), (0, cp - cout))
    be_vec = jnp.pad(beta.astype(jnp.float32), (0, cp - cout))

    # ---- pass 1: conv + per-channel sum / sumsq; grid = (batch, row tiles)
    rows1 = _pick_row_tile(hw, 512)
    y, ch_sum, ch_ssq = pl.pallas_call(
        conv_stats_kernel,
        grid=(n, hw // rows1),
        in_specs=[
            pl.BlockSpec((1, rows1, kp), lambda i, r: (i, r, 0)),
            pl.BlockSpec((kp, cp), lambda i, r: (0, 0)),
        ],
        out_specs=(
            pl.BlockSpec((1, rows1, cp), lambda i, r: (i, r, 0)),
            pl.BlockSpec((1, cp), lambda i, r: (0, 0)),   # resident accumulator
            pl.BlockSpec((1, cp), lambda i, r: (0, 0)),   # resident accumulator
        ),
        out_shape=(
            jax.ShapeDtypeStruct((n, hw, cp), jnp.bfloat16),
            jax.ShapeDtypeStruct((1, cp), jnp.float32),
            jax.ShapeDtypeStruct((1, cp), jnp.float32),
        ),
        compiler_params=pltpu.CompilerParams(
            # stats accumulate over both axes -> "arbitrary"
            dimension_semantics=("arbitrary", "arbitrary"),
        ),
    )(x_packed, w_packed)

    # ---- fold batch stats into one scale/shift per channel (tiny f32 work)
    # TODO(synk): E[y^2]-E[y]^2 cancels for very large means/counts; switch to
    # a shifted sum-of-squares if tolerances tighten.
    count = jnp.float32(n * hw)
    mean = ch_sum[0] / count
    var = jnp.maximum(ch_ssq[0] / count - mean * mean, 0.0)   # biased variance
    scale = g_vec * lax.rsqrt(var + BN_EPS)
    shift = be_vec - mean * scale

    # ---- pass 2: normalize + ReLU over large lane-dense row tiles
    total_rows = n * hw
    rows2 = _pick_row_tile(total_rows, 2048)
    out2 = pl.pallas_call(
        bn_relu_kernel,
        grid=(total_rows // rows2,),
        in_specs=[
            pl.BlockSpec((rows2, cp), lambda i: (i, 0)),
            pl.BlockSpec((1, cp), lambda i: (0, 0)),
            pl.BlockSpec((1, cp), lambda i: (0, 0)),
        ],
        out_specs=pl.BlockSpec((rows2, cp), lambda i: (i, 0)),
        out_shape=jax.ShapeDtypeStruct((total_rows, cp), jnp.float32),
        compiler_params=pltpu.CompilerParams(
            dimension_semantics=("parallel",),
        ),
    )(y.reshape(total_rows, cp), scale.reshape(1, cp), shift.reshape(1, cp))

    # ---- drop channel padding, back to NCHW
    out = out2.reshape(n, h, w, cp)[..., :cout]
    return jnp.transpose(out, (0, 3, 1, 2))


def reference_forward(x, weight, bias, gamma, beta):
    """Pure-JAX reference mirroring PyTorch Conv2d + BatchNorm2d(train) + ReLU."""
    y = lax.conv_general_dilated(
        x.astype(jnp.float32), weight.astype(jnp.float32),
        window_strides=(1, 1), padding=((1, 1), (1, 1)),
        dimension_numbers=("NCHW", "OIHW", "NCHW"))
    y = y + bias.reshape(1, -1, 1, 1)
    mean = jnp.mean(y, axis=(0, 2, 3), keepdims=True)
    var = jnp.mean((y - mean) ** 2, axis=(0, 2, 3), keepdims=True)
    y = (y - mean) / jnp.sqrt(var + BN_EPS)
    y = y * gamma.reshape(1, -1, 1, 1) + beta.reshape(1, -1, 1, 1)
    return jnp.maximum(y, 0.0)


def _bf16_round(a):
    return a.astype(jnp.bfloat16).astype(jnp.float32)


if __name__ == "__main__":
    key = jax.random.PRNGKey(0)
    k_x, k_w, k_b = jax.random.split(key, 3)

    # Small shapes consistent with the module: batch=2, in_ch=4, out_ch=8, 16x16.
    N, CIN, COUT, H, W = 2, 4, 8, 16, 16

    x = jax.random.normal(k_x, (N, CIN, H, W), dtype=jnp.float32)

    # Deterministic parameter init (synthetic; mimics Conv2d default scale).
    fan_in = CIN * 3 * 3
    bound = 1.0 / (fan_in ** 0.5)
    weight = jax.random.uniform(k_w, (COUT, CIN, 3, 3), jnp.float32, -bound, bound)
    bias = jax.random.uniform(k_b, (COUT,), jnp.float32, -bound, bound)
    gamma = jnp.ones((COUT,), jnp.float32)   # BatchNorm2d weight init
    beta = jnp.zeros((COUT,), jnp.float32)   # BatchNorm2d bias init

    out = unit_forward(x, weight, bias, gamma, beta)
    out = jax.block_until_ready(out)
    assert out.shape == (N, COUT, H, W)

    # Matched-precision reference (conv inputs rounded to bf16, f32 math).
    # Kernel additionally stores the conv intermediate in bf16, hence the
    # slightly looser tolerance.
    ref_match = reference_forward(_bf16_round(x), _bf16_round(weight),
                                  bias, gamma, beta)
    assert jnp.allclose(out, ref_match, atol=3e-2, rtol=3e-2), \
        "mismatch vs bf16-matched reference"

    # Full-f32 reference: differs by bf16 rounding of MXU operands/intermediate.
    ref_f32 = reference_forward(x, weight, bias, gamma, beta)
    assert jnp.allclose(out, ref_f32, atol=1e-1, rtol=1e-1), \
        "mismatch vs f32 reference"

    print("KERNEL_OK")
</pallas_src>

<mosaic_0001>
module attributes {stable_mosaic.version = 11 : i64} {
  func.func @conv_stats_kernel(%arg0: i32, %arg1: i32, %arg2: memref<1x256x48xbf16, #tpu.memory_space<vmem>>, %arg3: memref<48x128xbf16, #tpu.memory_space<vmem>>, %arg4: memref<1x256x128xbf16, #tpu.memory_space<vmem>>, %arg5: memref<1x128xf32, #tpu.memory_space<vmem>>, %arg6: memref<1x128xf32, #tpu.memory_space<vmem>>) attributes {dimension_semantics = [#tpu.dimension_semantics<arbitrary>, #tpu.dimension_semantics<arbitrary>], iteration_bounds = array<i64: 2, 1>, scalar_prefetch = 0 : i64, scratch_operands = 0 : i64, tpu.core_type = #tpu.core_type<tc>, window_params = [{transform_indices = @transform_0, window_bounds = array<i64: 1, 256, 48>}, {pipeline_mode = #tpu.pipeline_mode<synchronous>, transform_indices = @transform_1, window_bounds = array<i64: 48, 128>}, {transform_indices = @transform_2, window_bounds = array<i64: 1, 256, 128>}, {pipeline_mode = #tpu.pipeline_mode<synchronous>, transform_indices = @transform_3, window_bounds = array<i64: 1, 128>}, {pipeline_mode = #tpu.pipeline_mode<synchronous>, transform_indices = @transform_4, window_bounds = array<i64: 1, 128>}]} {
    %c0_i32 = arith.constant 0 : i32
    %0 = arith.cmpi eq, %arg0, %c0_i32 : i32
    %c0_i32_0 = arith.constant 0 : i32
    %1 = arith.cmpi eq, %arg1, %c0_i32_0 : i32
    %2 = arith.andi %0, %1 : i1
    %3 = arith.extui %2 : i1 to i32
    %c0_i32_1 = arith.constant 0 : i32
    %4 = arith.cmpi ne, %3, %c0_i32_1 : i32
    scf.if %4 {
      %cst_19 = arith.constant 0.000000e+00 : f32
      %24 = vector.broadcast %cst_19 : f32 to vector<1x128xf32>
      %c0_20 = arith.constant 0 : index
      %c0_21 = arith.constant 0 : index
      %25 = vector.load %arg5[%c0_20, %c0_21] : memref<1x128xf32, #tpu.memory_space<vmem>>, vector<1x128xf32>
      tpu.vector_store %arg5[%c0_20, %c0_21], %24 {strides = array<i32>} : memref<1x128xf32, #tpu.memory_space<vmem>>, vector<1x128xf32>,
      %cst_22 = arith.constant 0.000000e+00 : f32
      %26 = vector.broadcast %cst_22 : f32 to vector<1x128xf32>
      %c0_23 = arith.constant 0 : index
      %c0_24 = arith.constant 0 : index
      %27 = vector.load %arg6[%c0_23, %c0_24] : memref<1x128xf32, #tpu.memory_space<vmem>>, vector<1x128xf32>
      tpu.vector_store %arg6[%c0_23, %c0_24], %26 {strides = array<i32>} : memref<1x128xf32, #tpu.memory_space<vmem>>, vector<1x128xf32>,
    } else {
    }
    %c0 = arith.constant 0 : index
    %c0_2 = arith.constant 0 : index
    %c0_3 = arith.constant 0 : index
    %5 = vector.load %arg2[%c0, %c0_2, %c0_3] : memref<1x256x48xbf16, #tpu.memory_space<vmem>>, vector<1x256x48xbf16>
    %6 = vector.shape_cast %5 : vector<1x256x48xbf16> to vector<256x48xbf16>
    %c0_4 = arith.constant 0 : index
    %c0_5 = arith.constant 0 : index
    %7 = vector.load %arg3[%c0_4, %c0_5] : memref<48x128xbf16, #tpu.memory_space<vmem>>, vector<48x128xbf16>
    %cst = arith.constant dense<0.000000e+00> : vector<256x128xf32>
    %8 = tpu.matmul %6, %7, %cst {dimension_numbers = #tpu.dot_dimension_numbers<[1], [0], [0], [1], [0, 0, 1, 1], [], []>} : vector<256x48xbf16>, vector<48x128xbf16>, vector<256x128xf32> -> vector<256x128xf32>
    %9 = arith.truncf %8 : vector<256x128xf32> to vector<256x128xbf16>
    %c0_6 = arith.constant 0 : index
    %c0_7 = arith.constant 0 : index
    %c0_8 = arith.constant 0 : index
    %10 = vector.load %arg4[%c0_6, %c0_7, %c0_8] : memref<1x256x128xbf16, #tpu.memory_space<vmem>>, vector<1x256x128xbf16>
    %11 = vector.shape_cast %10 : vector<1x256x128xbf16> to vector<256x128xbf16>
    %12 = vector.shape_cast %9 : vector<256x128xbf16> to vector<1x256x128xbf16>
    tpu.vector_store %arg4[%c0_6, %c0_7, %c0_8], %12 {strides = array<i32>} : memref<1x256x128xbf16, #tpu.memory_space<vmem>>, vector<1x256x128xbf16>,
    %c0_9 = arith.constant 0 : index
    %c0_10 = arith.constant 0 : index
    %13 = vector.load %arg5[%c0_9, %c0_10] : memref<1x128xf32, #tpu.memory_space<vmem>>, vector<1x128xf32>
    %cst_11 = arith.constant dense<0.000000e+00> : vector<128xf32>
    %14 = vector.multi_reduction <add>, %8, %cst_11 [0] : vector<256x128xf32> to vector<128xf32>
    %15 = vector.shape_cast %14 : vector<128xf32> to vector<1x128xf32>
    %16 = arith.addf %13, %15 : vector<1x128xf32>
    %c0_12 = arith.constant 0 : index
    %c0_13 = arith.constant 0 : index
    %17 = vector.load %arg5[%c0_12, %c0_13] : memref<1x128xf32, #tpu.memory_space<vmem>>, vector<1x128xf32>
    tpu.vector_store %arg5[%c0_12, %c0_13], %16 {strides = array<i32>} : memref<1x128xf32, #tpu.memory_space<vmem>>, vector<1x128xf32>,
    %c0_14 = arith.constant 0 : index
    %c0_15 = arith.constant 0 : index
    %18 = vector.load %arg6[%c0_14, %c0_15] : memref<1x128xf32, #tpu.memory_space<vmem>>, vector<1x128xf32>
    %19 = arith.mulf %8, %8 : vector<256x128xf32>
    %cst_16 = arith.constant dense<0.000000e+00> : vector<128xf32>
    %20 = vector.multi_reduction <add>, %19, %cst_16 [0] : vector<256x128xf32> to vector<128xf32>
    %21 = vector.shape_cast %20 : vector<128xf32> to vector<1x128xf32>
    %22 = arith.addf %18, %21 : vector<1x128xf32>
    %c0_17 = arith.constant 0 : index
    %c0_18 = arith.constant 0 : index
    %23 = vector.load %arg6[%c0_17, %c0_18] : memref<1x128xf32, #tpu.memory_space<vmem>>, vector<1x128xf32>
    tpu.vector_store %arg6[%c0_17, %c0_18], %22 {strides = array<i32>} : memref<1x128xf32, #tpu.memory_space<vmem>>, vector<1x128xf32>,
    return
  }
  func.func @transform_0(%arg0: i32, %arg1: i32) -> (i32, i32, i32) {
    %c0_i32 = arith.constant 0 : i32
    %c0_i32_0 = arith.constant 0 : i32
    return %arg0, %arg1, %c0_i32 : i32, i32, i32
  }
  func.func @transform_1(%arg0: i32, %arg1: i32) -> (i32, i32) {
    %c0_i32 = arith.constant 0 : i32
    %c0_i32_0 = arith.constant 0 : i32
    %c0_i32_1 = arith.constant 0 : i32
    return %c0_i32, %c0_i32_0 : i32, i32
  }
  func.func @transform_2(%arg0: i32, %arg1: i32) -> (i32, i32, i32) {
    %c0_i32 = arith.constant 0 : i32
    %c0_i32_0 = arith.constant 0 : i32
    return %arg0, %arg1, %c0_i32 : i32, i32, i32
  }
  func.func @transform_3(%arg0: i32, %arg1: i32) -> (i32, i32) {
    %c0_i32 = arith.constant 0 : i32
    %c0_i32_0 = arith.constant 0 : i32
    %c0_i32_1 = arith.constant 0 : i32
    return %c0_i32, %c0_i32_0 : i32, i32
  }
  func.func @transform_4(%arg0: i32, %arg1: i32) -> (i32, i32) {
    %c0_i32 = arith.constant 0 : i32
    %c0_i32_0 = arith.constant 0 : i32
    %c0_i32_1 = arith.constant 0 : i32
    return %c0_i32, %c0_i32_0 : i32, i32
  }
}

module attributes {stable_mosaic.version = 11 : i64} {
  func.func @bn_relu_kernel(%arg0: i32, %arg1: memref<512x128xbf16, #tpu.memory_space<vmem>>, %arg2: memref<1x128xf32, #tpu.memory_space<vmem>>, %arg3: memref<1x128xf32, #tpu.memory_space<vmem>>, %arg4: memref<512x128xf32, #tpu.memory_space<vmem>>) attributes {dimension_semantics = [#tpu.dimension_semantics<parallel>], iteration_bounds = array<i64: 1>, scalar_prefetch = 0 : i64, scratch_operands = 0 : i64, tpu.core_type = #tpu.core_type<tc>, window_params = [{transform_indices = @transform_0, window_bounds = array<i64: 512, 128>}, {pipeline_mode = #tpu.pipeline_mode<synchronous>, transform_indices = @transform_1, window_bounds = array<i64: 1, 128>}, {pipeline_mode = #tpu.pipeline_mode<synchronous>, transform_indices = @transform_2, window_bounds = array<i64: 1, 128>}, {transform_indices = @transform_3, window_bounds = array<i64: 512, 128>}]} {
    %c0 = arith.constant 0 : index
    %c0_0 = arith.constant 0 : index
    %0 = vector.load %arg1[%c0, %c0_0] : memref<512x128xbf16, #tpu.memory_space<vmem>>, vector<512x128xbf16>
    %1 = arith.extf %0 : vector<512x128xbf16> to vector<512x128xf32>
    %c0_1 = arith.constant 0 : index
    %c0_2 = arith.constant 0 : index
    %2 = vector.load %arg2[%c0_1, %c0_2] : memref<1x128xf32, #tpu.memory_space<vmem>>, vector<1x128xf32>
    %3 = vector.broadcast %2 : vector<1x128xf32> to vector<512x128xf32>
    %4 = arith.mulf %1, %3 : vector<512x128xf32>
    %c0_3 = arith.constant 0 : index
    %c0_4 = arith.constant 0 : index
    %5 = vector.load %arg3[%c0_3, %c0_4] : memref<1x128xf32, #tpu.memory_space<vmem>>, vector<1x128xf32>
    %6 = vector.broadcast %5 : vector<1x128xf32> to vector<512x128xf32>
    %7 = arith.addf %4, %6 : vector<512x128xf32>
    %cst = arith.constant 0.000000e+00 : f32
    %8 = vector.broadcast %cst : f32 to vector<512x128xf32>
    %9 = arith.maximumf %7, %8 : vector<512x128xf32>
    %c0_5 = arith.constant 0 : index
    %c0_6 = arith.constant 0 : index
    %10 = vector.load %arg4[%c0_5, %c0_6] : memref<512x128xf32, #tpu.memory_space<vmem>>, vector<512x128xf32>
    tpu.vector_store %arg4[%c0_5, %c0_6], %9 {strides = array<i32>} : memref<512x128xf32, #tpu.memory_space<vmem>>, vector<512x128xf32>,
    return
  }
  func.func @transform_0(%arg0: i32) -> (i32, i32) {
    %c0_i32 = arith.constant 0 : i32
    %c0_i32_0 = arith.constant 0 : i32
    return %arg0, %c0_i32 : i32, i32
  }
  func.func @transform_1(%arg0: i32) -> (i32, i32) {
    %c0_i32 = arith.constant 0 : i32
    %c0_i32_0 = arith.constant 0 : i32
    %c0_i32_1 = arith.constant 0 : i32
    return %c0_i32, %c0_i32_0 : i32, i32
  }
  func.func @transform_2(%arg0: i32) -> (i32, i32) {
    %c0_i32 = arith.constant 0 : i32
    %c0_i32_0 = arith.constant 0 : i32
    %c0_i32_1 = arith.constant 0 : i32
    return %c0_i32, %c0_i32_0 : i32, i32
  }
  func.func @transform_3(%arg0: i32) -> (i32, i32) {
    %c0_i32 = arith.constant 0 : i32
    %c0_i32_0 = arith.constant 0 : i32
    return %arg0, %c0_i32 : i32, i32
  }
}

</mosaic_0001>

<llo_original>
// kernel: unit_forward.3
$region0: #{unit_forward.3}
  #allocation0 [shape = 'u32[]', space=smem, size = 0x4, offset = 0x4, fixed_abs, tag = 'smem constant byte address 0x4 - core index']
  #allocation1 [shape = 'u32[72,128]{1,0:T(1,128)}', space=vmem, size = 0x9000, scoped, tag = 'internal scratch']
  %s0 = inlined_call_operand.vmem [shape: bf16[512,128], index: 0, kind: input, shape index: {}]
  %s1 = inlined_call_operand.vmem [shape: f32[1,128], index: 1, kind: input, shape index: {}]
  %s2 = inlined_call_operand.vmem [shape: f32[1,128], index: 2, kind: input, shape index: {}]
  %s3 = inlined_call_operand.vmem [shape: f32[512,128], index: 3, kind: output, shape index: {}]
  %s4 = sld [smem:[#allocation0]]
  $region22: #{unit_forward.3} parent=0
    _
  %s6 = ssub.s32 1, %s4
  %s7 = scalar_select 0, %s6, %s4
  // Predicated region
  $region2: #{unit_forward.3} parent=0 // pred_check
    _
  $region3: #{unit_forward.3} parent=0 // pred_check_branch
    %9 = sbr.rel (0) target = $region5
  $region4: #{unit_forward.3} parent=0 // pred_region
    _
  $region5: #{unit_forward.3} parent=0 // pred_fallthru
    _
  // Predicated region
  $region6: #{unit_forward.3} parent=0 // pred_check
    _
  $region7: #{unit_forward.3} parent=0 // pred_check_branch
    %11 = sbr.rel (0) target = $region9
  $region8: #{unit_forward.3} parent=0 // pred_region
    _
  $region9: #{unit_forward.3} parent=0 // pred_fallthru
    _
  // Predicated region
  $region10: #{unit_forward.3} parent=0 // pred_check
    _
  $region11: #{unit_forward.3} parent=0 // pred_check_branch
    %13 = sbr.rel (0) target = $region13
  $region12: #{unit_forward.3} parent=0 // pred_region
    _
  $region13: #{unit_forward.3} parent=0 // pred_fallthru
    _
  %v14 = vld [vmem:[%s0] sm:$0xf]
  %v15 = vld [vmem:[%s0 + $0x4] sm:$0xf]
  %v16 = vld [vmem:[%s0 + $0x8] sm:$0xf]
  %v17 = vld [vmem:[%s0 + $0xc] sm:$0xf]
  %v18 = vld [vmem:[%s0 + $0x10] sm:$0xf]
  %v19 = vld [vmem:[%s0 + $0x14] sm:$0xf]
  %v20 = vld [vmem:[%s0 + $0x18] sm:$0xf]
  %v21 = vld [vmem:[%s0 + $0x1c] sm:$0xf]
  %v22 = vld [vmem:[%s0 + $0x20] sm:$0xf]
  %v23 = vld [vmem:[%s0 + $0x24] sm:$0xf]
  %v24 = vld [vmem:[%s0 + $0x28] sm:$0xf]
  %v25 = vld [vmem:[%s0 + $0x2c] sm:$0xf]
  %v26 = vld [vmem:[%s0 + $0x30] sm:$0xf]
  %v27 = vld [vmem:[%s0 + $0x34] sm:$0xf]
  %v28 = vld [vmem:[%s0 + $0x38] sm:$0xf]
  %v29 = vld [vmem:[%s0 + $0x3c] sm:$0xf]
  %v30 = vld [vmem:[%s0 + $0x40] sm:$0xf]
  %v31 = vld [vmem:[%s0 + $0x44] sm:$0xf]
  %v32 = vld [vmem:[%s0 + $0x48] sm:$0xf]
  %v33 = vld [vmem:[%s0 + $0x4c] sm:$0xf]
  %v34 = vld [vmem:[%s0 + $0x50] sm:$0xf]
  %v35 = vld [vmem:[%s0 + $0x54] sm:$0xf]
  %v36 = vld [vmem:[%s0 + $0x58] sm:$0xf]
  %v37 = vld [vmem:[%s0 + $0x5c] sm:$0xf]
  %v38 = vld [vmem:[%s0 + $0x60] sm:$0xf]
  %v39 = vld [vmem:[%s0 + $0x64] sm:$0xf]
  %v40 = vld [vmem:[%s0 + $0x68] sm:$0xf]
  %v41 = vld [vmem:[%s0 + $0x6c] sm:$0xf]
  %v42 = vld [vmem:[%s0 + $0x70] sm:$0xf]
  %v43 = vld [vmem:[%s0 + $0x74] sm:$0xf]
  %v44 = vld [vmem:[%s0 + $0x78] sm:$0xf]
  %v45 = vld [vmem:[%s0 + $0x7c] sm:$0xf]
  %v46 = vld [vmem:[%s0 + $0x80] sm:$0xf]
  %v47 = vld [vmem:[%s0 + $0x84] sm:$0xf]
  %v48 = vld [vmem:[%s0 + $0x88] sm:$0xf]
  %v49 = vld [vmem:[%s0 + $0x8c] sm:$0xf]
  %v50 = vld [vmem:[%s0 + $0x90] sm:$0xf]
  %v51 = vld [vmem:[%s0 + $0x94] sm:$0xf]
  %v52 = vld [vmem:[%s0 + $0x98] sm:$0xf]
  %v53 = vld [vmem:[%s0 + $0x9c] sm:$0xf]
  %v54 = vld [vmem:[%s0 + $0xa0] sm:$0xf]
  %v55 = vld [vmem:[%s0 + $0xa4] sm:$0xf]
  %v56 = vld [vmem:[%s0 + $0xa8] sm:$0xf]
  %v57 = vld [vmem:[%s0 + $0xac] sm:$0xf]
  %v58 = vld [vmem:[%s0 + $0xb0] sm:$0xf]
  %v59 = vld [vmem:[%s0 + $0xb4] sm:$0xf]
  %v60 = vld [vmem:[%s0 + $0xb8] sm:$0xf]
  %v61 = vld [vmem:[%s0 + $0xbc] sm:$0xf]
  %v62 = vld [vmem:[%s0 + $0xc0] sm:$0xf]
  %v63 = vld [vmem:[%s0 + $0xc4] sm:$0xf]
  %v64 = vld [vmem:[%s0 + $0xc8] sm:$0xf]
  %v65 = vld [vmem:[%s0 + $0xcc] sm:$0xf]
  %v66 = vld [vmem:[%s0 + $0xd0] sm:$0xf]
  %v67 = vld [vmem:[%s0 + $0xd4] sm:$0xf]
  %v68 = vld [vmem:[%s0 + $0xd8] sm:$0xf]
  %v69 = vld [vmem:[%s0 + $0xdc] sm:$0xf]
  %v70 = vld [vmem:[%s0 + $0xe0] sm:$0xf]
  %v71 = vld [vmem:[%s0 + $0xe4] sm:$0xf]
  %v72 = vld [vmem:[%s0 + $0xe8] sm:$0xf]
  %v73 = vld [vmem:[%s0 + $0xec] sm:$0xf]
  %v74 = vld [vmem:[%s0 + $0xf0] sm:$0xf]
  %v75 = vld [vmem:[%s0 + $0xf4] sm:$0xf]
  %v76 = vld [vmem:[%s0 + $0xf8] sm:$0xf]
  %v77 = vld [vmem:[%s0 + $0xfc] sm:$0xf]
  %v78 = vunpack.c.l.bf16 %v14
  %v79 = vunpack.c.l.bf16 %v15
  %v80 = vunpack.c.l.bf16 %v16
  %v81 = vunpack.c.l.bf16 %v17
  %v82 = vunpack.c.l.bf16 %v18
  %v83 = vunpack.c.l.bf16 %v19
  %v84 = vunpack.c.l.bf16 %v20
  %v85 = vunpack.c.l.bf16 %v21
  %v86 = vunpack.c.l.bf16 %v22
  %v87 = vunpack.c.l.bf16 %v23
  %v88 = vunpack.c.l.bf16 %v24
  %v89 = vunpack.c.l.bf16 %v25
  %v90 = vunpack.c.l.bf16 %v26
  %v91 = vunpack.c.l.bf16 %v27
  %v92 = vunpack.c.l.bf16 %v28
  %v93 = vunpack.c.l.bf16 %v29
  %v94 = vunpack.c.l.bf16 %v30
  %v95 = vunpack.c.l.bf16 %v31
  %v96 = vunpack.c.l.bf16 %v32
  %v97 = vunpack.c.l.bf16 %v33
  %v98 = vunpack.c.l.bf16 %v34
  %v99 = vunpack.c.l.bf16 %v35
  %v100 = vunpack.c.l.bf16 %v36
  %v101 = vunpack.c.l.bf16 %v37
  %v102 = vunpack.c.l.bf16 %v38
  %v103 = vunpack.c.l.bf16 %v39
  %v104 = vunpack.c.l.bf16 %v40
  %v105 = vunpack.c.l.bf16 %v41
  %v106 = vunpack.c.l.bf16 %v42
  %v107 = vunpack.c.l.bf16 %v43
  %v108 = vunpack.c.l.bf16 %v44
  %v109 = vunpack.c.l.bf16 %v45
  %v110 = vunpack.c.l.bf16 %v46
  %v111 = vunpack.c.l.bf16 %v47
  %v112 = vunpack.c.l.bf16 %v48
  %v113 = vunpack.c.l.bf16 %v49
  %v114 = vunpack.c.l.bf16 %v50
  %v115 = vunpack.c.l.bf16 %v51
  %v116 = vunpack.c.l.bf16 %v52
  %v117 = vunpack.c.l.bf16 %v53
  %v118 = vunpack.c.l.bf16 %v54
  %v119 = vunpack.c.l.bf16 %v55
  %v120 = vunpack.c.l.bf16 %v56
  %v121 = vunpack.c.l.bf16 %v57
  %v122 = vunpack.c.l.bf16 %v58
  %v123 = vunpack.c.l.bf16 %v59
  %v124 = vunpack.c.l.bf16 %v60
  %v125 = vunpack.c.l.bf16 %v61
  %v126 = vunpack.c.l.bf16 %v62
  %v127 = vunpack.c.l.bf16 %v63
  %v128 = vunpack.c.l.bf16 %v64
  %v129 = vunpack.c.l.bf16 %v65
  %v130 = vunpack.c.l.bf16 %v66
  %v131 = vunpack.c.l.bf16 %v67
  %v132 = vunpack.c.l.bf16 %v68
  %v133 = vunpack.c.l.bf16 %v69
  %v134 = vunpack.c.l.bf16 %v70
  %v135 = vunpack.c.l.bf16 %v71
  %v136 = vunpack.c.l.bf16 %v72
  %v137 = vunpack.c.l.bf16 %v73
  %v138 = vunpack.c.l.bf16 %v74
  %v139 = vunpack.c.l.bf16 %v75
  %v140 = vunpack.c.l.bf16 %v76
  %v141 = vunpack.c.l.bf16 %v77
  %v142 = vld [vmem:[%s1] sm:$0x1]
  %v144 = vperm.slane %v142, 0
  %v146 = vmul.f32 %v78, %v144
  %v147 = vmul.f32 %v79, %v144
  %v148 = vmul.f32 %v80, %v144
  %v149 = vmul.f32 %v81, %v144
  %v150 = vmul.f32 %v82, %v144
  %v151 = vmul.f32 %v83, %v144
  %v152 = vmul.f32 %v84, %v144
  %v153 = vmul.f32 %v85, %v144
  %v154 = vmul.f32 %v86, %v144
  %v155 = vmul.f32 %v87, %v144
  %v156 = vmul.f32 %v88, %v144
  %v157 = vmul.f32 %v89, %v144
  %v158 = vmul.f32 %v90, %v144
  %v159 = vmul.f32 %v91, %v144
  %v160 = vmul.f32 %v92, %v144
  %v161 = vmul.f32 %v93, %v144
  %v162 = vmul.f32 %v94, %v144
  %v163 = vmul.f32 %v95, %v144
  %v164 = vmul.f32 %v96, %v144
  %v165 = vmul.f32 %v97, %v144
  %v166 = vmul.f32 %v98, %v144
  %v167 = vmul.f32 %v99, %v144
  %v168 = vmul.f32 %v100, %v144
  %v169 = vmul.f32 %v101, %v144
  %v170 = vmul.f32 %v102, %v144
  %v171 = vmul.f32 %v103, %v144
  %v172 = vmul.f32 %v104, %v144
  %v173 = vmul.f32 %v105, %v144
  %v174 = vmul.f32 %v106, %v144
  %v175 = vmul.f32 %v107, %v144
  %v176 = vmul.f32 %v108, %v144
  %v177 = vmul.f32 %v109, %v144
  %v178 = vmul.f32 %v110, %v144
  %v179 = vmul.f32 %v111, %v144
  %v180 = vmul.f32 %v112, %v144
  %v181 = vmul.f32 %v113, %v144
  %v182 = vmul.f32 %v114, %v144
  %v183 = vmul.f32 %v115, %v144
  %v184 = vmul.f32 %v116, %v144
  %v185 = vmul.f32 %v117, %v144
  %v186 = vmul.f32 %v118, %v144
  %v187 = vmul.f32 %v119, %v144
  %v188 = vmul.f32 %v120, %v144
  %v189 = vmul.f32 %v121, %v144
  %v190 = vmul.f32 %v122, %v144
  %v191 = vmul.f32 %v123, %v144
  %v192 = vmul.f32 %v124, %v144
  %v193 = vmul.f32 %v125, %v144
  %v194 = vmul.f32 %v126, %v144
  %v195 = vmul.f32 %v127, %v144
  %v196 = vmul.f32 %v128, %v144
  %v197 = vmul.f32 %v129, %v144
  %v198 = vmul.f32 %v130, %v144
  %v199 = vmul.f32 %v131, %v144
  %v200 = vmul.f32 %v132, %v144
  %v201 = vmul.f32 %v133, %v144
  %v202 = vmul.f32 %v134, %v144
  %v203 = vmul.f32 %v135, %v144
  %v204 = vmul.f32 %v136, %v144
  %v205 = vmul.f32 %v137, %v144
  %v206 = vmul.f32 %v138, %v144
  %v207 = vmul.f32 %v139, %v144
  %v208 = vmul.f32 %v140, %v144
  %v209 = vmul.f32 %v141, %v144
  %v210 = vld [vmem:[%s2] sm:$0x1]
  %v212 = vperm.slane %v210, 0
  %v214 = vadd.f32 %v146, %v212
  %v215 = vadd.f32 %v147, %v212
  %v216 = vadd.f32 %v148, %v212
  %v217 = vadd.f32 %v149, %v212
  %v218 = vadd.f32 %v150, %v212
  %v219 = vadd.f32 %v151, %v212
  %v220 = vadd.f32 %v152, %v212
  %v221 = vadd.f32 %v153, %v212
  %v222 = vadd.f32 %v154, %v212
  %v223 = vadd.f32 %v155, %v212
  %v224 = vadd.f32 %v156, %v212
  %v225 = vadd.f32 %v157, %v212
  %v226 = vadd.f32 %v158, %v212
  %v227 = vadd.f32 %v159, %v212
  %v228 = vadd.f32 %v160, %v212
  %v229 = vadd.f32 %v161, %v212
  %v230 = vadd.f32 %v162, %v212
  %v231 = vadd.f32 %v163, %v212
  %v232 = vadd.f32 %v164, %v212
  %v233 = vadd.f32 %v165, %v212
  %v234 = vadd.f32 %v166, %v212
  %v235 = vadd.f32 %v167, %v212
  %v236 = vadd.f32 %v168, %v212
  %v237 = vadd.f32 %v169, %v212
  %v238 = vadd.f32 %v170, %v212
  %v239 = vadd.f32 %v171, %v212
  %v240 = vadd.f32 %v172, %v212
  %v241 = vadd.f32 %v173, %v212
  %v242 = vadd.f32 %v174, %v212
  %v243 = vadd.f32 %v175, %v212
  %v244 = vadd.f32 %v176, %v212
  %v245 = vadd.f32 %v177, %v212
  %v246 = vadd.f32 %v178, %v212
  %v247 = vadd.f32 %v179, %v212
  %v248 = vadd.f32 %v180, %v212
  %v249 = vadd.f32 %v181, %v212
  %v250 = vadd.f32 %v182, %v212
  %v251 = vadd.f32 %v183, %v212
  %v252 = vadd.f32 %v184, %v212
  %v253 = vadd.f32 %v185, %v212
  %v254 = vadd.f32 %v186, %v212
  %v255 = vadd.f32 %v187, %v212
  %v256 = vadd.f32 %v188, %v212
  %v257 = vadd.f32 %v189, %v212
  %v258 = vadd.f32 %v190, %v212
  %v259 = vadd.f32 %v191, %v212
  %v260 = vadd.f32 %v192, %v212
  %v261 = vadd.f32 %v193, %v212
  %v262 = vadd.f32 %v194, %v212
  %v263 = vadd.f32 %v195, %v212
  %v264 = vadd.f32 %v196, %v212
  %v265 = vadd.f32 %v197, %v212
  %v266 = vadd.f32 %v198, %v212
  %v267 = vadd.f32 %v199, %v212
  %v268 = vadd.f32 %v200, %v212
  %v269 = vadd.f32 %v201, %v212
  %v270 = vadd.f32 %v202, %v212
  %v271 = vadd.f32 %v203, %v212
  %v272 = vadd.f32 %v204, %v212
  %v273 = vadd.f32 %v205, %v212
  %v274 = vadd.f32 %v206, %v212
  %v275 = vadd.f32 %v207, %v212
  %v276 = vadd.f32 %v208, %v212
  %v277 = vadd.f32 %v209, %v212
  %v278 = vmax.f32 %v214, 0.0
  %v279 = vmax.f32 %v215, 0.0
  %v280 = vmax.f32 %v216, 0.0
  %v281 = vmax.f32 %v217, 0.0
  %v282 = vmax.f32 %v218, 0.0
  %v283 = vmax.f32 %v219, 0.0
  %v284 = vmax.f32 %v220, 0.0
  %v285 = vmax.f32 %v221, 0.0
  %v286 = vmax.f32 %v222, 0.0
  %v287 = vmax.f32 %v223, 0.0
  %v288 = vmax.f32 %v224, 0.0
  %v289 = vmax.f32 %v225, 0.0
  %v290 = vmax.f32 %v226, 0.0
  %v291 = vmax.f32 %v227, 0.0
  %v292 = vmax.f32 %v228, 0.0
  %v293 = vmax.f32 %v229, 0.0
  %v294 = vmax.f32 %v230, 0.0
  %v295 = vmax.f32 %v231, 0.0
  %v296 = vmax.f32 %v232, 0.0
  %v297 = vmax.f32 %v233, 0.0
  %v298 = vmax.f32 %v234, 0.0
  %v299 = vmax.f32 %v235, 0.0
  %v300 = vmax.f32 %v236, 0.0
  %v301 = vmax.f32 %v237, 0.0
  %v302 = vmax.f32 %v238, 0.0
  %v303 = vmax.f32 %v239, 0.0
  %v304 = vmax.f32 %v240, 0.0
  %v305 = vmax.f32 %v241, 0.0
  %v306 = vmax.f32 %v242, 0.0
  %v307 = vmax.f32 %v243, 0.0
  %v308 = vmax.f32 %v244, 0.0
  %v309 = vmax.f32 %v245, 0.0
  %v310 = vmax.f32 %v246, 0.0
  %v311 = vmax.f32 %v247, 0.0
  %v312 = vmax.f32 %v248, 0.0
  %v313 = vmax.f32 %v249, 0.0
  %v314 = vmax.f32 %v250, 0.0
  %v315 = vmax.f32 %v251, 0.0
  %v316 = vmax.f32 %v252, 0.0
  %v317 = vmax.f32 %v253, 0.0
  %v318 = vmax.f32 %v254, 0.0
  %v319 = vmax.f32 %v255, 0.0
  %v320 = vmax.f32 %v256, 0.0
  %v321 = vmax.f32 %v257, 0.0
  %v322 = vmax.f32 %v258, 0.0
  %v323 = vmax.f32 %v259, 0.0
  %v324 = vmax.f32 %v260, 0.0
  %v325 = vmax.f32 %v261, 0.0
  %v326 = vmax.f32 %v262, 0.0
  %v327 = vmax.f32 %v263, 0.0
  %v328 = vmax.f32 %v264, 0.0
  %v329 = vmax.f32 %v265, 0.0
  %v330 = vmax.f32 %v266, 0.0
  %v331 = vmax.f32 %v267, 0.0
  %v332 = vmax.f32 %v268, 0.0
  %v333 = vmax.f32 %v269, 0.0
  %v334 = vmax.f32 %v270, 0.0
  %v335 = vmax.f32 %v271, 0.0
  %v336 = vmax.f32 %v272, 0.0
  %v337 = vmax.f32 %v273, 0.0
  %v338 = vmax.f32 %v274, 0.0
  %v339 = vmax.f32 %v275, 0.0
  %v340 = vmax.f32 %v276, 0.0
  %v341 = vmax.f32 %v277, 0.0
  %342 = vst [vmem:[%s3] sm:$0xff] %v278
  %343 = vst [vmem:[%s3 + $0x8] sm:$0xff] %v279
  %344 = vst [vmem:[%s3 + $0x10] sm:$0xff] %v280
  %345 = vst [vmem:[%s3 + $0x18] sm:$0xff] %v281
  %346 = vst [vmem:[%s3 + $0x20] sm:$0xff] %v282
  %347 = vst [vmem:[%s3 + $0x28] sm:$0xff] %v283
  %348 = vst [vmem:[%s3 + $0x30] sm:$0xff] %v284
  %349 = vst [vmem:[%s3 + $0x38] sm:$0xff] %v285
  %350 = vst [vmem:[%s3 + $0x40] sm:$0xff] %v286
  %351 = vst [vmem:[%s3 + $0x48] sm:$0xff] %v287
  %352 = vst [vmem:[%s3 + $0x50] sm:$0xff] %v288
  %353 = vst [vmem:[%s3 + $0x58] sm:$0xff] %v289
  %354 = vst [vmem:[%s3 + $0x60] sm:$0xff] %v290
  %355 = vst [vmem:[%s3 + $0x68] sm:$0xff] %v291
  %356 = vst [vmem:[%s3 + $0x70] sm:$0xff] %v292
  %357 = vst [vmem:[%s3 + $0x78] sm:$0xff] %v293
  %358 = vst [vmem:[%s3 + $0x80] sm:$0xff] %v294
  %359 = vst [vmem:[%s3 + $0x88] sm:$0xff] %v295
  %360 = vst [vmem:[%s3 + $0x90] sm:$0xff] %v296
  %361 = vst [vmem:[%s3 + $0x98] sm:$0xff] %v297
  %362 = vst [vmem:[%s3 + $0xa0] sm:$0xff] %v298
  %363 = vst [vmem:[%s3 + $0xa8] sm:$0xff] %v299
  %364 = vst [vmem:[%s3 + $0xb0] sm:$0xff] %v300
  %365 = vst [vmem:[%s3 + $0xb8] sm:$0xff] %v301
  %366 = vst [vmem:[%s3 + $0xc0] sm:$0xff] %v302
  %367 = vst [vmem:[%s3 + $0xc8] sm:$0xff] %v303
  %368 = vst [vmem:[%s3 + $0xd0] sm:$0xff] %v304
  %369 = vst [vmem:[%s3 + $0xd8] sm:$0xff] %v305
  %370 = vst [vmem:[%s3 + $0xe0] sm:$0xff] %v306
  %371 = vst [vmem:[%s3 + $0xe8] sm:$0xff] %v307
  %372 = vst [vmem:[%s3 + $0xf0] sm:$0xff] %v308
  %373 = vst [vmem:[%s3 + $0xf8] sm:$0xff] %v309
  %374 = vst [vmem:[%s3 + $0x100] sm:$0xff] %v310
  %375 = vst [vmem:[%s3 + $0x108] sm:$0xff] %v311
  %376 = vst [vmem:[%s3 + $0x110] sm:$0xff] %v312
  %377 = vst [vmem:[%s3 + $0x118] sm:$0xff] %v313
  %378 = vst [vmem:[%s3 + $0x120] sm:$0xff] %v314
  %379 = vst [vmem:[%s3 + $0x128] sm:$0xff] %v315
  %380 = vst [vmem:[%s3 + $0x130] sm:$0xff] %v316
  %381 = vst [vmem:[%s3 + $0x138] sm:$0xff] %v317
  %382 = vst [vmem:[%s3 + $0x140] sm:$0xff] %v318
  %383 = vst [vmem:[%s3 + $0x148] sm:$0xff] %v319
  %384 = vst [vmem:[%s3 + $0x150] sm:$0xff] %v320
  %385 = vst [vmem:[%s3 + $0x158] sm:$0xff] %v321
  %386 = vst [vmem:[%s3 + $0x160] sm:$0xff] %v322
  %387 = vst [vmem:[%s3 + $0x168] sm:$0xff] %v323
  %388 = vst [vmem:[%s3 + $0x170] sm:$0xff] %v324
  %389 = vst [vmem:[%s3 + $0x178] sm:$0xff] %v325
  %390 = vst [vmem:[%s3 + $0x180] sm:$0xff] %v326
  %391 = vst [vmem:[%s3 + $0x188] sm:$0xff] %v327
  %392 = vst [vmem:[%s3 + $0x190] sm:$0xff] %v328
  %393 = vst [vmem:[%s3 + $0x198] sm:$0xff] %v329
  %394 = vst [vmem:[%s3 + $0x1a0] sm:$0xff] %v330
  %395 = vst [vmem:[%s3 + $0x1a8] sm:$0xff] %v331
  %396 = vst [vmem:[%s3 + $0x1b0] sm:$0xff] %v332
  %397 = vst [vmem:[%s3 + $0x1b8] sm:$0xff] %v333
  %398 = vst [vmem:[%s3 + $0x1c0] sm:$0xff] %v334
  %399 = vst [vmem:[%s3 + $0x1c8] sm:$0xff] %v335
  %400 = vst [vmem:[%s3 + $0x1d0] sm:$0xff] %v336
  %401 = vst [vmem:[%s3 + $0x1d8] sm:$0xff] %v337
  %402 = vst [vmem:[%s3 + $0x1e0] sm:$0xff] %v338
  %403 = vst [vmem:[%s3 + $0x1e8] sm:$0xff] %v339
  %404 = vst [vmem:[%s3 + $0x1f0] sm:$0xff] %v340
  %405 = vst [vmem:[%s3 + $0x1f8] sm:$0xff] %v341
  // Predicated region
  $region14: #{unit_forward.3} parent=0 // pred_check
    _
  $region15: #{unit_forward.3} parent=0 // pred_check_branch
    %407 = sbr.rel (0) target = $region17
  $region16: #{unit_forward.3} parent=0 // pred_region
    _
  $region17: #{unit_forward.3} parent=0 // pred_fallthru
    _
  // Predicated region
  $region18: #{unit_forward.3} parent=0 // pred_check
    _
  $region19: #{unit_forward.3} parent=0 // pred_check_branch
    %409 = sbr.rel (0) target = $region21
  $region20: #{unit_forward.3} parent=0 // pred_region
    _
  $region21: #{unit_forward.3} parent=0 // pred_fallthru
    _

// kernel: unit_forward.2
$region0: #{unit_forward.2}
  #allocation0 [shape = 'u32[]', space=smem, size = 0x4, offset = 0x4, fixed_abs, tag = 'smem constant byte address 0x4 - core index']
  #allocation1 [shape = 'u32[72,128]{1,0:T(1,128)}', space=vmem, size = 0x9000, scoped, tag = 'internal scratch']
  %s0 = inlined_call_operand.vmem [shape: bf16[2,256,48], index: 0, kind: input, shape index: {}]
  %s1 = inlined_call_operand.vmem [shape: bf16[48,128], index: 1, kind: input, shape index: {}]
  %s2 = inlined_call_operand.vmem [shape: bf16[2,256,128], index: 2, kind: output, shape index: {0}]
  %s3 = inlined_call_operand.vmem [shape: f32[1,128], index: 3, kind: output, shape index: {1}]
  %s4 = inlined_call_operand.vmem [shape: f32[1,128], index: 4, kind: output, shape index: {2}]
  %5 = xla_tuple %s2, %s3, %s4
  %s6 = sld [smem:[#allocation0]]
  $region61: #{unit_forward.2} parent=0
    _
  %s8 = ssub.s32 1, %s6
  %s9 = scalar_select 0, %s8, %s6
  loop: start=0, step=1, limit=4
  $region2: #{unit_forward.2} parent=0 // loop_pre_header
    _
  $region3: #{unit_forward.2} parent=0 // loop_header
    %s11 = sphi 0, %s15
    %p12 = scmp.ge.s32.totalorder %s11, 4
    %s18 = sphi 0, %s30
    %s19 = sphi 0, %s26
    %s20 = sphi 0, %s18
    %s21 = sphi 0, %s19
    %s22 = sphi 0, %s20
    %s23 = sphi 0, %s21
    %s35 = sphi 0, %s37
    %s38 = sphi 0, %s35
    %s39 = sphi 0, %s38
    %s55 = sphi 0, %s39
    %s59 = sphi 0, %s59
    %s61 = sphi 0, %s59
    %s62 = sphi 0, %s61
    %s76 = sphi 0, %s62
    %s84 = sphi 0, %s86
    %s87 = sphi 0, %s84
    %s88 = sphi 0, %s87
    %s104 = sphi 0, %s88
    %s108 = sphi 0, %s108
    %s110 = sphi 0, %s108
    %s111 = sphi 0, %s110
    %s125 = sphi 0, %s111
    %s129 = sphi 0, %s129
    %s131 = sphi 0, %s129
    %s132 = sphi 0, %s131
    %s146 = sphi 0, %s132
  $region4: #{unit_forward.2} parent=0 // loop_header_branch
    %14 = sbr.rel (%p12) target = $region8
  $region5: #{unit_forward.2} parent=0 // loop_body
    %s16 = ssub.s32 %s11, 1
    %s17 = ssub.s32 %s11, 2
    %s24 = sadd.s32 1, %s19
    %p25 = scmp.ge.s32.totalorder %s24, 1
    %s26 = scalar_select %p25, 0, %s24
    %s27 = sadd.s32 1, %s18
    %s28 = scalar_select %p25, %s27, %s18
    %p29 = scmp.ge.s32.totalorder %s28, 2
    %s30 = scalar_select %p29, 0, %s28
    %s31 = ssub.s32 %s18, %s30
    %s32 = ssub.s32 %s19, %s26
    %s33 = sor.u32 %s31, %s32
    %p34 = scmp.eq.s32.totalorder %s33, 0
    %s36 = sadd.s32 %s35, 1
    %s37 = scalar_select %p34, %s35, %s36
    %p40 = pneg %p34
    %p41 = scmp.eq.s32.totalorder %s11, 1
    %p42 = por %p40, %p41
    %p43 = scmp.ne.s32.totalorder %s35, %s38
    %p44 = scmp.eq.s32.totalorder %s11, 0
    %p45 = por %p43, %p44
    %p46 = scmp.ne.s32.totalorder %s35, %s38
    %p47 = scmp.eq.s32.totalorder %s16, 1
    %p48 = por %p46, %p47
    %p49 = scmp.ne.s32.totalorder %s38, %s39
    %p50 = scmp.eq.s32.totalorder %s16, 0
    %p51 = por %p49, %p50
    %p52 = scmp.ne.s32.totalorder %s38, %s39
    %p53 = scmp.eq.s32.totalorder %s17, 1
    %p54 = por %p52, %p53
    %p56 = scmp.ne.s32.totalorder %s39, %s55
    %p57 = scmp.eq.s32.totalorder %s17, 0
    %p58 = por %p56, %p57
    %s60 = sadd.s32 %s59, 1
    %p63 = scmp.eq.s32.totalorder %s11, 1
    %p64 = scmp.ne.s32.totalorder %s59, %s61
    %p65 = scmp.eq.s32.totalorder %s11, 0
    %p66 = por %p64, %p65
    %p67 = scmp.ne.s32.totalorder %s59, %s61
    %p68 = scmp.eq.s32.totalorder %s16, 1
    %p69 = por %p67, %p68
    %p70 = scmp.ne.s32.totalorder %s61, %s62
    %p71 = scmp.eq.s32.totalorder %s16, 0
    %p72 = por %p70, %p71
    %p73 = scmp.ne.s32.totalorder %s61, %s62
    %p74 = scmp.eq.s32.totalorder %s17, 1
    %p75 = por %p73, %p74
    %p77 = scmp.ne.s32.totalorder %s62, %s76
    %p78 = scmp.eq.s32.totalorder %s17, 0
    %p79 = por %p77, %p78
    %s80 = ssub.s32 %s18, %s30
    %s81 = ssub.s32 %s19, %s26
    %s82 = sor.u32 %s80, %s81
    %p83 = scmp.eq.s32.totalorder %s82, 0
    %s85 = sadd.s32 %s84, 1
    %s86 = scalar_select %p83, %s84, %s85
    %p89 = pneg %p83
    %p90 = scmp.eq.s32.totalorder %s11, 1
    %p91 = por %p89, %p90
    %p92 = scmp.ne.s32.totalorder %s84, %s87
    %p93 = scmp.eq.s32.totalorder %s11, 0
    %p94 = por %p92, %p93
    %p95 = scmp.ne.s32.totalorder %s84, %s87
    %p96 = scmp.eq.s32.totalorder %s16, 1
    %p97 = por %p95, %p96
    %p98 = scmp.ne.s32.totalorder %s87, %s88
    %p99 = scmp.eq.s32.totalorder %s16, 0
    %p100 = por %p98, %p99
    %p101 = scmp.ne.s32.totalorder %s87, %s88
    %p102 = scmp.eq.s32.totalorder %s17, 1
    %p103 = por %p101, %p102
    %p105 = scmp.ne.s32.totalorder %s88, %s104
    %p106 = scmp.eq.s32.totalorder %s17, 0
    %p107 = por %p105, %p106
    %s109 = sadd.s32 %s108, 1
    %p112 = scmp.eq.s32.totalorder %s11, 1
    %p113 = scmp.ne.s32.totalorder %s108, %s110
    %p114 = scmp.eq.s32.totalorder %s11, 0
    %p115 = por %p113, %p114
    %p116 = scmp.ne.s32.totalorder %s108, %s110
    %p117 = scmp.eq.s32.totalorder %s16, 1
    %p118 = por %p116, %p117
    %p119 = scmp.ne.s32.totalorder %s110, %s111
    %p120 = scmp.eq.s32.totalorder %s16, 0
    %p121 = por %p119, %p120
    %p122 = scmp.ne.s32.totalorder %s110, %s111
    %p123 = scmp.eq.s32.totalorder %s17, 1
    %p124 = por %p122, %p123
    %p126 = scmp.ne.s32.totalorder %s111, %s125
    %p127 = scmp.eq.s32.totalorder %s17, 0
    %p128 = por %p126, %p127
    %s130 = sadd.s32 %s129, 1
    %p133 = scmp.eq.s32.totalorder %s11, 1
    %p134 = scmp.ne.s32.totalorder %s129, %s131
    %p135 = scmp.eq.s32.totalorder %s11, 0
    %p136 = por %p134, %p135
    %p137 = scmp.ne.s32.totalorder %s129, %s131
    %p138 = scmp.eq.s32.totalorder %s16, 1
    %p139 = por %p137, %p138
    %p140 = scmp.ne.s32.totalorder %s131, %s132
    %p141 = scmp.eq.s32.totalorder %s16, 0
    %p142 = por %p140, %p141
    %p143 = scmp.ne.s32.totalorder %s131, %s132
    %p144 = scmp.eq.s32.totalorder %s17, 1
    %p145 = por %p143, %p144
    %p147 = scmp.ne.s32.totalorder %s132, %s146
    %p148 = scmp.eq.s32.totalorder %s17, 0
    %p149 = por %p147, %p148
    %p150 = scmp.le.s32.totalorder 1, %s11
    %p151 = scmp.lt.s32.totalorder %s11, 3
    %p152 = pnand %p150, %p151
    %p153 = pneg %p152
    // Predicated region
    $region9: #{unit_forward.2} parent=5 // pred_check
      _
    $region10: #{unit_forward.2} parent=5 // pred_check_branch
      %155 = sbr.rel (%p152) target = $region12
    $region11: #{unit_forward.2} parent=5 // pred_region
      %s156 = ssub.s32 %s11, 1
      // Predicated region
      $region13: #{unit_forward.2} parent=11 // pred_check
        %p157 = pneg %p72
      $region14: #{unit_forward.2} parent=11 // pred_check_branch
        %159 = sbr.rel (%p157) target = $region16
      $region15: #{unit_forward.2} parent=11 // pred_region
        _
      $region16: #{unit_forward.2} parent=11 // pred_fallthru
        _
    $region12: #{unit_forward.2} parent=5 // pred_fallthru
      _
    %p160 = scmp.lt.s32.totalorder %s11, 2
    // Predicated region
    $region17: #{unit_forward.2} parent=5 // pred_check
      %p161 = pneg %p160
    $region18: #{unit_forward.2} parent=5 // pred_check_branch
      %163 = sbr.rel (%p161) target = $region20
    $region19: #{unit_forward.2} parent=5 // pred_region
      // Predicated region
      $region21: #{unit_forward.2} parent=19 // pred_check
        %p164 = pneg %p45
      $region22: #{unit_forward.2} parent=19 // pred_check_branch
        %166 = sbr.rel (%p164) target = $region24
      $region23: #{unit_forward.2} parent=19 // pred_region
        %s167 = smul.u32 32, %s19
        %p168 = scmp.lt.s32.totalorder %s18, 1
        %s169 = scalar_select %p168, %s18, 1
        %p170 = scmp.lt.s32.totalorder %s167, 31
        %s171 = scalar_select %p170, %s167, 31
        %s172 = smul.addr %s169, 32
        %s173 = sadd.s32 %s171, %s172
        %s174 = smul.addr %s173, 4
        %s175 = scalar_lea.vmem %s0, %s174
        %s176 = smul.u32 32, %s19
      $region24: #{unit_forward.2} parent=19 // pred_fallthru
        _
    $region20: #{unit_forward.2} parent=5 // pred_fallthru
      _
    %p177 = scmp.le.s32.totalorder 1, %s11
    %p178 = scmp.lt.s32.totalorder %s11, 3
    %p179 = pnand %p177, %p178
    %p180 = pneg %p179
    // Predicated region
    $region25: #{unit_forward.2} parent=5 // pred_check
      _
    $region26: #{unit_forward.2} parent=5 // pred_check_branch
      %182 = sbr.rel (%p179) target = $region28
    $region27: #{unit_forward.2} parent=5 // pred_region
      %s183 = ssub.s32 %s11, 1
      %s184 = smul.u32 32, %s21
      %p185 = scmp.lt.s32.totalorder %s20, 1
      %s186 = scalar_select %p185, %s20, 1
      %p187 = scmp.lt.s32.totalorder %s184, 31
      %s188 = scalar_select %p187, %s184, 31
      %s189 = smul.addr %s186, 32
      %s190 = sadd.s32 %s188, %s189
      %s191 = smul.addr %s190, 4
      %s192 = scalar_lea.vmem %s0, %s191
      %p193 = pneg %p51
      %p194 = pneg %p48
      %p195 = pneg %p72
      %p196 = pneg %p69
      %p197 = pneg %p100
      %p198 = pneg %p97
      %s199 = smul.u32 32, %s21
      %p200 = scmp.lt.s32.totalorder %s20, 1
      %s201 = scalar_select %p200, %s20, 1
      %p202 = scmp.lt.s32.totalorder %s199, 31
      %s203 = scalar_select %p202, %s199, 31
      %s204 = smul.addr %s201, 32
      %s205 = sadd.s32 %s203, %s204
      %s206 = smul.addr %s205, 4
      %s207 = scalar_lea.vmem %s2, %s206
      %p208 = pneg %p121
      %p209 = pneg %p118
      %p210 = pneg %p142
      %p211 = pneg %p139
      %s212 = smul.u32 32, %s21
      %p213 = scmp.lt.s32.totalorder %s20, 1
      %s214 = scalar_select %p213, %s20, 1
      %p215 = scmp.lt.s32.totalorder %s212, 31
      %s216 = scalar_select %p215, %s212, 31
      %s217 = smul.addr %s214, 32
      %s218 = sadd.s32 %s216, %s217
      %s219 = smul.addr %s218, 4
      %s220 = scalar_lea.vmem %s0, %s219
      %s221 = smul.u32 32, %s21
      %s222 = smul.u32 32, %s21
      %p223 = scmp.lt.s32.totalorder %s20, 1
      %s224 = scalar_select %p223, %s20, 1
      %p225 = scmp.lt.s32.totalorder %s222, 31
      %s226 = scalar_select %p225, %s222, 31
      %s227 = smul.addr %s224, 32
      %s228 = sadd.s32 %s226, %s227
      %s229 = smul.addr %s228, 4
      %s230 = scalar_lea.vmem %s2, %s229
      %s231 = smul.u32 32, %s21
      %p233 = scmp.eq.s32.totalorder %s20, 0
      %p234 = scmp.eq.s32.totalorder %s21, 0
      %p235 = pnand %p233, %p234
      %p236 = pneg %p235
      // Predicated region
      $region29: #{unit_forward.2} parent=27 // pred_check
        _
      $region30: #{unit_forward.2} parent=27 // pred_check_branch
        %238 = sbr.rel (%p235) target = $region32
      $region31: #{unit_forward.2} parent=27 // pred_region
        %239 = vst [vmem:[%s3] sm:$0x1] 0.0
        %240 = vst [vmem:[%s4] sm:$0x1] 0.0
      $region32: #{unit_forward.2} parent=27 // pred_fallthru
        _
      %v241 = vld [vmem:[%s220] sm:$0xf]
      %v242 = vld [vmem:[%s220 + $0x4] sm:$0xf]
      %v243 = vld [vmem:[%s220 + $0x8] sm:$0xf]
      %v244 = vld [vmem:[%s220 + $0xc] sm:$0xf]
      %v245 = vld [vmem:[%s220 + $0x10] sm:$0xf]
      %v246 = vld [vmem:[%s220 + $0x14] sm:$0xf]
      %v247 = vld [vmem:[%s220 + $0x18] sm:$0xf]
      %v248 = vld [vmem:[%s220 + $0x1c] sm:$0xf]
      %v249 = vld [vmem:[%s220 + $0x20] sm:$0xf]
      %v250 = vld [vmem:[%s220 + $0x24] sm:$0xf]
      %v251 = vld [vmem:[%s220 + $0x28] sm:$0xf]
      %v252 = vld [vmem:[%s220 + $0x2c] sm:$0xf]
      %v253 = vld [vmem:[%s220 + $0x30] sm:$0xf]
      %v254 = vld [vmem:[%s220 + $0x34] sm:$0xf]
      %v255 = vld [vmem:[%s220 + $0x38] sm:$0xf]
      %v256 = vld [vmem:[%s220 + $0x3c] sm:$0xf]
      %v257 = vld [vmem:[%s220 + $0x40] sm:$0xf]
      %v258 = vld [vmem:[%s220 + $0x44] sm:$0xf]
      %v259 = vld [vmem:[%s220 + $0x48] sm:$0xf]
      %v260 = vld [vmem:[%s220 + $0x4c] sm:$0xf]
      %v261 = vld [vmem:[%s220 + $0x50] sm:$0xf]
      %v262 = vld [vmem:[%s220 + $0x54] sm:$0xf]
      %v263 = vld [vmem:[%s220 + $0x58] sm:$0xf]
      %v264 = vld [vmem:[%s220 + $0x5c] sm:$0xf]
      %v265 = vld [vmem:[%s220 + $0x60] sm:$0xf]
      %v266 = vld [vmem:[%s220 + $0x64] sm:$0xf]
      %v267 = vld [vmem:[%s220 + $0x68] sm:$0xf]
      %v268 = vld [vmem:[%s220 + $0x6c] sm:$0xf]
      %v269 = vld [vmem:[%s220 + $0x70] sm:$0xf]
      %v270 = vld [vmem:[%s220 + $0x74] sm:$0xf]
      %v271 = vld [vmem:[%s220 + $0x78] sm:$0xf]
      %v272 = vld [vmem:[%s220 + $0x7c] sm:$0xf]
      %v273 = vld [vmem:[%s1] sm:$0xf]
      %v274 = vld [vmem:[%s1 + $0x4] sm:$0xf]
      %v275 = vld [vmem:[%s1 + $0x8] sm:$0xf]
      %v276 = vld [vmem:[%s1 + $0xc] sm:$0xf]
      %v277 = vld [vmem:[%s1 + $0x10] sm:$0xf]
      %v278 = vld [vmem:[%s1 + $0x14] sm:$0xf]
      %v311 = vunpack.c.l.b16 %v241
      %v312 = vunpack.c.l.b16 %v242
      %v313 = vunpack.c.l.b16 %v243
      %v314 = vunpack.c.l.b16 %v244
      %v315 = vunpack.c.l.b16 %v245
      %v316 = vunpack.c.l.b16 %v246
      %v317 = vunpack.c.l.b16 %v247
      %v318 = vunpack.c.l.b16 %v248
      %v319 = vunpack.c.l.b16 %v249
      %v320 = vunpack.c.l.b16 %v250
      %v321 = vunpack.c.l.b16 %v251
      %v322 = vunpack.c.l.b16 %v252
      %v323 = vunpack.c.l.b16 %v253
      %v324 = vunpack.c.l.b16 %v254
      %v325 = vunpack.c.l.b16 %v255
      %v326 = vunpack.c.l.b16 %v256
      %v327 = vunpack.c.l.b16 %v257
      %v328 = vunpack.c.l.b16 %v258
      %v329 = vunpack.c.l.b16 %v259
      %v330 = vunpack.c.l.b16 %v260
      %v331 = vunpack.c.l.b16 %v261
      %v332 = vunpack.c.l.b16 %v262
      %v333 = vunpack.c.l.b16 %v263
      %v334 = vunpack.c.l.b16 %v264
      %v335 = vunpack.c.l.b16 %v265
      %v336 = vunpack.c.l.b16 %v266
      %v337 = vunpack.c.l.b16 %v267
      %v338 = vunpack.c.l.b16 %v268
      %v339 = vunpack.c.l.b16 %v269
      %v340 = vunpack.c.l.b16 %v270
      %v341 = vunpack.c.l.b16 %v271
      %v342 = vunpack.c.l.b16 %v272
      %v343 = vpack.c.b16 %v312, %v311
      %v344 = vpack.c.b16 %v314, %v313
      %v345 = vpack.c.b16 %v316, %v315
      %v346 = vpack.c.b16 %v318, %v317
      %v347 = vpack.c.b16 %v320, %v319
      %v348 = vpack.c.b16 %v322, %v321
      %v349 = vpack.c.b16 %v324, %v323
      %v350 = vpack.c.b16 %v326, %v325
      %v351 = vpack.c.b16 %v328, %v327
      %v352 = vpack.c.b16 %v330, %v329
      %v353 = vpack.c.b16 %v332, %v331
      %v354 = vpack.c.b16 %v334, %v333
      %v355 = vpack.c.b16 %v336, %v335
      %v356 = vpack.c.b16 %v338, %v337
      %v357 = vpack.c.b16 %v340, %v339
      %v358 = vpack.c.b16 %v342, %v341
      %v365 = vunpack.c.l.b16 %v273
      %v366 = vunpack.c.l.b16 %v274
      %v367 = vunpack.c.l.b16 %v275
      %v368 = vunpack.c.l.b16 %v276
      %v369 = vunpack.c.l.b16 %v277
      %v370 = vunpack.c.l.b16 %v278
      %v371 = vpack.c.b16 %v366, %v365
      %v372 = vpack.c.b16 %v368, %v367
      %v373 = vpack.c.b16 %v370, %v369
      %vm377 = vcmask 392192
      %v379 = vsel %vm377, %v343, 0
      %v382 = vsel %vm377, %v344, 0
      %v385 = vsel %vm377, %v345, 0
      %v388 = vsel %vm377, %v346, 0
      %v391 = vsel %vm377, %v347, 0
      %v394 = vsel %vm377, %v348, 0
      %v397 = vsel %vm377, %v349, 0
      %v400 = vsel %vm377, %v350, 0
      %v403 = vsel %vm377, %v351, 0
      %v406 = vsel %vm377, %v352, 0
      %v409 = vsel %vm377, %v353, 0
      %v412 = vsel %vm377, %v354, 0
      %v415 = vsel %vm377, %v355, 0
      %v418 = vsel %vm377, %v356, 0
      %v421 = vsel %vm377, %v357, 0
      %v424 = vsel %vm377, %v358, 0
      %426 = vmatpush.bf16.msra.mxu0 0
      %427 = vmatpush.bf16.msra.mxu0 0
      %428 = vmatpush.bf16.msra.mxu0 0
      %429 = vmatpush.bf16.msra.mxu0 0
      %430 = vmatpush.bf16.msra.mxu0 0
      %431 = vmatpush.bf16.msra.mxu0 %v373
      %432 = vmatpush.bf16.msra.mxu0 %v372
      %433 = vmatpush.bf16.msra.mxu0 %v371
      %434 = vmatmul.bf16.gmra.mxu0 %v379
      %v435 = vpop.f32.mrf.mxu0
      %v436 = vadd.f32 0.0, %v435
      %v437 = vpop.f32.mrf.mxu0
      %v438 = vadd.f32 0.0, %v437
      %439 = vmatmul.bf16.gmra.mxu0 %v382
      %v440 = vpop.f32.mrf.mxu0
      %v441 = vadd.f32 0.0, %v440
      %v442 = vpop.f32.mrf.mxu0
      %v443 = vadd.f32 0.0, %v442
      %444 = vmatmul.bf16.gmra.mxu0 %v385
      %v445 = vpop.f32.mrf.mxu0
      %v446 = vadd.f32 0.0, %v445
      %v447 = vpop.f32.mrf.mxu0
      %v448 = vadd.f32 0.0, %v447
      %449 = vmatmul.bf16.gmra.mxu0 %v388
      %v450 = vpop.f32.mrf.mxu0
      %v451 = vadd.f32 0.0, %v450
      %v452 = vpop.f32.mrf.mxu0
      %v453 = vadd.f32 0.0, %v452
      %454 = vmatmul.bf16.gmra.mxu0 %v391
      %v455 = vpop.f32.mrf.mxu0
      %v456 = vadd.f32 0.0, %v455
      %v457 = vpop.f32.mrf.mxu0
      %v458 = vadd.f32 0.0, %v457
      %459 = vmatmul.bf16.gmra.mxu0 %v394
      %v460 = vpop.f32.mrf.mxu0
      %v461 = vadd.f32 0.0, %v460
      %v462 = vpop.f32.mrf.mxu0
      %v463 = vadd.f32 0.0, %v462
      %464 = vmatmul.bf16.gmra.mxu0 %v397
      %v465 = vpop.f32.mrf.mxu0
      %v466 = vadd.f32 0.0, %v465
      %v467 = vpop.f32.mrf.mxu0
      %v468 = vadd.f32 0.0, %v467
      %469 = vmatmul.bf16.gmra.mxu0 %v400
      %v470 = vpop.f32.mrf.mxu0
      %v471 = vadd.f32 0.0, %v470
      %v472 = vpop.f32.mrf.mxu0
      %v473 = vadd.f32 0.0, %v472
      %474 = vmatmul.bf16.gmra.mxu0 %v403
      %v475 = vpop.f32.mrf.mxu0
      %v476 = vadd.f32 0.0, %v475
      %v477 = vpop.f32.mrf.mxu0
      %v478 = vadd.f32 0.0, %v477
      %479 = vmatmul.bf16.gmra.mxu0 %v406
      %v480 = vpop.f32.mrf.mxu0
      %v481 = vadd.f32 0.0, %v480
      %v482 = vpop.f32.mrf.mxu0
      %v483 = vadd.f32 0.0, %v482
      %484 = vmatmul.bf16.gmra.mxu0 %v409
      %v485 = vpop.f32.mrf.mxu0
      %v486 = vadd.f32 0.0, %v485
      %v487 = vpop.f32.mrf.mxu0
      %v488 = vadd.f32 0.0, %v487
      %489 = vmatmul.bf16.gmra.mxu0 %v412
      %v490 = vpop.f32.mrf.mxu0
      %v491 = vadd.f32 0.0, %v490
      %v492 = vpop.f32.mrf.mxu0
      %v493 = vadd.f32 0.0, %v492
      %494 = vmatmul.bf16.gmra.mxu0 %v415
      %v495 = vpop.f32.mrf.mxu0
      %v496 = vadd.f32 0.0, %v495
      %v497 = vpop.f32.mrf.mxu0
      %v498 = vadd.f32 0.0, %v497
      %499 = vmatmul.bf16.gmra.mxu0 %v418
      %v500 = vpop.f32.mrf.mxu0
      %v501 = vadd.f32 0.0, %v500
      %v502 = vpop.f32.mrf.mxu0
      %v503 = vadd.f32 0.0, %v502
      %504 = vmatmul.bf16.gmra.mxu0 %v421
      %v505 = vpop.f32.mrf.mxu0
      %v506 = vadd.f32 0.0, %v505
      %v507 = vpop.f32.mrf.mxu0
      %v508 = vadd.f32 0.0, %v507
      %509 = vmatmul.bf16.gmra.mxu0 %v424
      %v510 = vpop.f32.mrf.mxu0
      %v511 = vadd.f32 0.0, %v510
      %v512 = vpop.f32.mrf.mxu0
      %v513 = vadd.f32 0.0, %v512
      %514 = vdwg.mxu0
      %v515 = vpack.c.bf16 %v436, %v436
      %v516 = vpack.c.bf16 %v438, %v438
      %v517 = vpack.c.bf16 %v441, %v441
      %v518 = vpack.c.bf16 %v443, %v443
      %v519 = vpack.c.bf16 %v446, %v446
      %v520 = vpack.c.bf16 %v448, %v448
      %v521 = vpack.c.bf16 %v451, %v451
      %v522 = vpack.c.bf16 %v453, %v453
      %v523 = vpack.c.bf16 %v456, %v456
      %v524 = vpack.c.bf16 %v458, %v458
      %v525 = vpack.c.bf16 %v461, %v461
      %v526 = vpack.c.bf16 %v463, %v463
      %v527 = vpack.c.bf16 %v466, %v466
      %v528 = vpack.c.bf16 %v468, %v468
      %v529 = vpack.c.bf16 %v471, %v471
      %v530 = vpack.c.bf16 %v473, %v473
      %v531 = vpack.c.bf16 %v476, %v476
      %v532 = vpack.c.bf16 %v478, %v478
      %v533 = vpack.c.bf16 %v481, %v481
      %v534 = vpack.c.bf16 %v483, %v483
      %v535 = vpack.c.bf16 %v486, %v486
      %v536 = vpack.c.bf16 %v488, %v488
      %v537 = vpack.c.bf16 %v491, %v491
      %v538 = vpack.c.bf16 %v493, %v493
      %v539 = vpack.c.bf16 %v496, %v496
      %v540 = vpack.c.bf16 %v498, %v498
      %v541 = vpack.c.bf16 %v501, %v501
      %v542 = vpack.c.bf16 %v503, %v503
      %v543 = vpack.c.bf16 %v506, %v506
      %v544 = vpack.c.bf16 %v508, %v508
      %v545 = vpack.c.bf16 %v511, %v511
      %v546 = vpack.c.bf16 %v513, %v513
      %547 = vst [vmem:[%s230] sm:$0xf] %v515
      %548 = vst [vmem:[%s230 + $0x4] sm:$0xf] %v516
      %549 = vst [vmem:[%s230 + $0x8] sm:$0xf] %v517
      %550 = vst [vmem:[%s230 + $0xc] sm:$0xf] %v518
      %551 = vst [vmem:[%s230 + $0x10] sm:$0xf] %v519
      %552 = vst [vmem:[%s230 + $0x14] sm:$0xf] %v520
      %553 = vst [vmem:[%s230 + $0x18] sm:$0xf] %v521
      %554 = vst [vmem:[%s230 + $0x1c] sm:$0xf] %v522
      %555 = vst [vmem:[%s230 + $0x20] sm:$0xf] %v523
      %556 = vst [vmem:[%s230 + $0x24] sm:$0xf] %v524
      %557 = vst [vmem:[%s230 + $0x28] sm:$0xf] %v525
      %558 = vst [vmem:[%s230 + $0x2c] sm:$0xf] %v526
      %559 = vst [vmem:[%s230 + $0x30] sm:$0xf] %v527
      %560 = vst [vmem:[%s230 + $0x34] sm:$0xf] %v528
      %561 = vst [vmem:[%s230 + $0x38] sm:$0xf] %v529
      %562 = vst [vmem:[%s230 + $0x3c] sm:$0xf] %v530
      %563 = vst [vmem:[%s230 + $0x40] sm:$0xf] %v531
      %564 = vst [vmem:[%s230 + $0x44] sm:$0xf] %v532
      %565 = vst [vmem:[%s230 + $0x48] sm:$0xf] %v533
      %566 = vst [vmem:[%s230 + $0x4c] sm:$0xf] %v534
      %567 = vst [vmem:[%s230 + $0x50] sm:$0xf] %v535
      %568 = vst [vmem:[%s230 + $0x54] sm:$0xf] %v536
      %569 = vst [vmem:[%s230 + $0x58] sm:$0xf] %v537
      %570 = vst [vmem:[%s230 + $0x5c] sm:$0xf] %v538
      %571 = vst [vmem:[%s230 + $0x60] sm:$0xf] %v539
      %572 = vst [vmem:[%s230 + $0x64] sm:$0xf] %v540
      %573 = vst [vmem:[%s230 + $0x68] sm:$0xf] %v541
      %574 = vst [vmem:[%s230 + $0x6c] sm:$0xf] %v542
      %575 = vst [vmem:[%s230 + $0x70] sm:$0xf] %v543
      %576 = vst [vmem:[%s230 + $0x74] sm:$0xf] %v544
      %577 = vst [vmem:[%s230 + $0x78] sm:$0xf] %v545
      %578 = vst [vmem:[%s230 + $0x7c] sm:$0xf] %v546
      %v579 = vld [vmem:[%s3] sm:$0x1]
      %v580 = vadd.f32 %v436, %v438
      %v581 = vadd.f32 %v580, %v441
      %v582 = vadd.f32 %v581, %v443
      %v583 = vadd.f32 %v582, %v446
      %v584 = vadd.f32 %v583, %v448
      %v585 = vadd.f32 %v584, %v451
      %v586 = vadd.f32 %v585, %v453
      %v587 = vadd.f32 %v586, %v456
      %v588 = vadd.f32 %v587, %v458
      %v589 = vadd.f32 %v588, %v461
      %v590 = vadd.f32 %v589, %v463
      %v591 = vadd.f32 %v590, %v466
      %v592 = vadd.f32 %v591, %v468
      %v593 = vadd.f32 %v592, %v471
      %v594 = vadd.f32 %v593, %v473
      %v595 = vadd.f32 %v594, %v476
      %v596 = vadd.f32 %v595, %v478
      %v597 = vadd.f32 %v596, %v481
      %v598 = vadd.f32 %v597, %v483
      %v599 = vadd.f32 %v598, %v486
      %v600 = vadd.f32 %v599, %v488
      %v601 = vadd.f32 %v600, %v491
      %v602 = vadd.f32 %v601, %v493
      %v603 = vadd.f32 %v602, %v496
      %v604 = vadd.f32 %v603, %v498
      %v605 = vadd.f32 %v604, %v501
      %v606 = vadd.f32 %v605, %v503
      %v607 = vadd.f32 %v606, %v506
      %v608 = vadd.f32 %v607, %v508
      %v609 = vadd.f32 %v608, %v511
      %v610 = vadd.f32 %v609, %v513
      %v611 = vrot.slane %v610, 4
      %v612 = vadd.f32 %v610, %v611
      %v613 = vrot.slane %v612, 2
      %v614 = vadd.f32 %v612, %v613
      %v615 = vrot.slane %v614, 1
      %v616 = vadd.f32 %v614, %v615
      %v617 = vadd.f32 %v579, %v616
      %618 = vst [vmem:[%s3] sm:$0x1] %v617
      %v619 = vld [vmem:[%s4] sm:$0x1]
      %v620 = vmul.f32 %v436, %v436
      %v621 = vmul.f32 %v438, %v438
      %v622 = vmul.f32 %v441, %v441
      %v623 = vmul.f32 %v443, %v443
      %v624 = vmul.f32 %v446, %v446
      %v625 = vmul.f32 %v448, %v448
      %v626 = vmul.f32 %v451, %v451
      %v627 = vmul.f32 %v453, %v453
      %v628 = vmul.f32 %v456, %v456
      %v629 = vmul.f32 %v458, %v458
      %v630 = vmul.f32 %v461, %v461
      %v631 = vmul.f32 %v463, %v463
      %v632 = vmul.f32 %v466, %v466
      %v633 = vmul.f32 %v468, %v468
      %v634 = vmul.f32 %v471, %v471
      %v635 = vmul.f32 %v473, %v473
      %v636 = vmul.f32 %v476, %v476
      %v637 = vmul.f32 %v478, %v478
      %v638 = vmul.f32 %v481, %v481
      %v639 = vmul.f32 %v483, %v483
      %v640 = vmul.f32 %v486, %v486
      %v641 = vmul.f32 %v488, %v488
      %v642 = vmul.f32 %v491, %v491
      %v643 = vmul.f32 %v493, %v493
      %v644 = vmul.f32 %v496, %v496
      %v645 = vmul.f32 %v498, %v498
      %v646 = vmul.f32 %v501, %v501
      %v647 = vmul.f32 %v503, %v503
      %v648 = vmul.f32 %v506, %v506
      %v649 = vmul.f32 %v508, %v508
      %v650 = vmul.f32 %v511, %v511
      %v651 = vmul.f32 %v513, %v513
      %v652 = vadd.f32 %v620, %v621
      %v653 = vadd.f32 %v652, %v622
      %v654 = vadd.f32 %v653, %v623
      %v655 = vadd.f32 %v654, %v624
      %v656 = vadd.f32 %v655, %v625
      %v657 = vadd.f32 %v656, %v626
      %v658 = vadd.f32 %v657, %v627
      %v659 = vadd.f32 %v658, %v628
      %v660 = vadd.f32 %v659, %v629
      %v661 = vadd.f32 %v660, %v630
      %v662 = vadd.f32 %v661, %v631
      %v663 = vadd.f32 %v662, %v632
      %v664 = vadd.f32 %v663, %v633
      %v665 = vadd.f32 %v664, %v634
      %v666 = vadd.f32 %v665, %v635
      %v667 = vadd.f32 %v666, %v636
      %v668 = vadd.f32 %v667, %v637
      %v669 = vadd.f32 %v668, %v638
      %v670 = vadd.f32 %v669, %v639
      %v671 = vadd.f32 %v670, %v640
      %v672 = vadd.f32 %v671, %v641
      %v673 = vadd.f32 %v672, %v642
      %v674 = vadd.f32 %v673, %v643
      %v675 = vadd.f32 %v674, %v644
      %v676 = vadd.f32 %v675, %v645
      %v677 = vadd.f32 %v676, %v646
      %v678 = vadd.f32 %v677, %v647
      %v679 = vadd.f32 %v678, %v648
      %v680 = vadd.f32 %v679, %v649
      %v681 = vadd.f32 %v680, %v650
      %v682 = vadd.f32 %v681, %v651
      %v683 = vrot.slane %v682, 4
      %v684 = vadd.f32 %v682, %v683
      %v685 = vrot.slane %v684, 2
      %v686 = vadd.f32 %v684, %v685
      %v687 = vrot.slane %v686, 1
      %v688 = vadd.f32 %v686, %v687
      %v689 = vadd.f32 %v619, %v688
      %690 = vst [vmem:[%s4] sm:$0x1] %v689
      %s691 = smul.u32 32, %s21
      %p692 = scmp.lt.s32.totalorder %s20, 1
      %s693 = scalar_select %p692, %s20, 1
      %p694 = scmp.lt.s32.totalorder %s691, 31
      %s695 = scalar_select %p694, %s691, 31
      %s696 = smul.addr %s693, 32
      %s697 = sadd.s32 %s695, %s696
      %s698 = smul.addr %s697, 4
      %s699 = scalar_lea.vmem %s2, %s698
      // Predicated region
      $region33: #{unit_forward.2} parent=27 // pred_check
        %p700 = pneg %p97
      $region34: #{unit_forward.2} parent=27 // pred_check_branch
        %702 = sbr.rel (%p700) target = $region36
      $region35: #{unit_forward.2} parent=27 // pred_region
        %s703 = smul.u32 32, %s21
      $region36: #{unit_forward.2} parent=27 // pred_fallthru
        _
      // Predicated region
      $region37: #{unit_forward.2} parent=27 // pred_check
        %p704 = pneg %p118
      $region38: #{unit_forward.2} parent=27 // pred_check_branch
        %706 = sbr.rel (%p704) target = $region40
      $region39: #{unit_forward.2} parent=27 // pred_region
        _
      $region40: #{unit_forward.2} parent=27 // pred_fallthru
        _
      // Predicated region
      $region41: #{unit_forward.2} parent=27 // pred_check
        %p707 = pneg %p139
      $region42: #{unit_forward.2} parent=27 // pred_check_branch
        %709 = sbr.rel (%p707) target = $region44
      $region43: #{unit_forward.2} parent=27 // pred_region
        _
      $region44: #{unit_forward.2} parent=27 // pred_fallthru
        _
      // Predicated region
      $region45: #{unit_forward.2} parent=27 // pred_check
        %p710 = pneg %p118
      $region46: #{unit_forward.2} parent=27 // pred_check_branch
        %712 = sbr.rel (%p710) target = $region48
      $region47: #{unit_forward.2} parent=27 // pred_region
        _
      $region48: #{unit_forward.2} parent=27 // pred_fallthru
        _
      // Predicated region
      $region49: #{unit_forward.2} parent=27 // pred_check
        %p713 = pneg %p139
      $region50: #{unit_forward.2} parent=27 // pred_check_branch
        %715 = sbr.rel (%p713) target = $region52
      $region51: #{unit_forward.2} parent=27 // pred_region
        _
      $region52: #{unit_forward.2} parent=27 // pred_fallthru
        _
    $region28: #{unit_forward.2} parent=5 // pred_fallthru
      _
    %p716 = scmp.le.s32.totalorder 2, %s11
    // Predicated region
    $region53: #{unit_forward.2} parent=5 // pred_check
      %p717 = pneg %p716
    $region54: #{unit_forward.2} parent=5 // pred_check_branch
      %719 = sbr.rel (%p717) target = $region56
    $region55: #{unit_forward.2} parent=5 // pred_region
      %s720 = ssub.s32 %s11, 2
      // Predicated region
      $region57: #{unit_forward.2} parent=55 // pred_check
        %p721 = pneg %p103
      $region58: #{unit_forward.2} parent=55 // pred_check_branch
        %723 = sbr.rel (%p721) target = $region60
      $region59: #{unit_forward.2} parent=55 // pred_region
        %s724 = smul.u32 32, %s23
        %p725 = scmp.lt.s32.totalorder %s22, 1
        %s726 = scalar_select %p725, %s22, 1
        %p727 = scmp.lt.s32.totalorder %s724, 31
        %s728 = scalar_select %p727, %s724, 31
        %s729 = smul.addr %s726, 32
        %s730 = sadd.s32 %s728, %s729
        %s731 = smul.addr %s730, 4
        %s732 = scalar_lea.vmem %s2, %s731
      $region60: #{unit_forward.2} parent=55 // pred_fallthru
        _
    $region56: #{unit_forward.2} parent=5 // pred_fallthru
      _
  $region6: #{unit_forward.2} parent=0 // loop_footer
    %s15 = sadd.s32 1, %s11
  $region7: #{unit_forward.2} parent=0 // loop_footer_branch
    %10 = sbr.rel target = $region3
  $region8: #{unit_forward.2} parent=0 // loop_exit
    _

</llo_original>
